<compile_context>
chip_gen: v5e
topology: v5e:2x2
jax: 0.10.0
libtpu: 0.0.40
codegen_flags: <defaults>
</compile_context>

<pallas_src>
import functools
import math

import jax
import jax.numpy as jnp
from jax import lax
from jax.experimental import pallas as pl
from jax.experimental.pallas import tpu as pltpu

_EPS = 1e-12
_LANE = 128  # lane-dense slab width


def _kl_sum_kernel(a_ref, o_ref, acc_ref, *, row_tile, valid_rows, needs_mask):
    """Accumulate sum(a * log(a + eps)) over this slice's row blocks into an
    (8, 128) f32 VMEM accumulator; reduce once and write the slice's partial
    sum to its (1, 1) SMEM output block on the last inner step."""
    c = pl.program_id(0)   # TensorCore slice ("parallel")
    i = pl.program_id(1)   # reduction step ("arbitrary")

    @pl.when(i == 0)
    def _init():
        acc_ref[...] = jnp.zeros_like(acc_ref)

    # Unclamped linear block id -> first row this step *would* cover.
    row_start = (c * pl.num_programs(1) + i) * row_tile

    def _accumulate(mask_rows):
        a = a_ref[...].astype(jnp.float32)
        if mask_rows:
            row_ids = lax.broadcasted_iota(jnp.int32, a.shape, 0) + row_start
            # Mask BEFORE the log so garbage rows (partial boundary DMA /
            # clamped duplicate blocks) cannot produce NaN/Inf.
            a = jnp.where(row_ids < valid_rows, a, jnp.float32(0.0))
        # 0 * log(0 + 1e-12) == 0 in f32, so masked rows contribute nothing.
        t = a * jnp.log(a + jnp.float32(_EPS))
        # Sublane-group fold (row_tile, 128) -> (8, 128); reshape is tile-local.
        acc_ref[...] += t.reshape(row_tile // 8, 8, _LANE).sum(axis=0)

    if needs_mask:
        # Only blocks that reach past the valid rows pay the iota/cmp/select
        # cost.  The predicate also covers the clamped overflow blocks, whose
        # unclamped row_start >= valid_rows (they mask to all-zero).
        masked = row_start + row_tile > valid_rows

        @pl.when(masked)
        def _():
            _accumulate(True)

        @pl.when(jnp.logical_not(masked))
        def _():
            _accumulate(False)
    else:
        _accumulate(False)

    @pl.when(i == pl.num_programs(1) - 1)
    def _finalize():
        o_ref[0, 0] = jnp.sum(acc_ref[...])


def _num_tensorcores():
    """Best-effort TensorCore count (2 on v7x, 1 on v5e/v6e)."""
    try:
        info = pltpu.get_tpu_info()
        for name in ("num_cores", "core_count", "num_tensorcores",
                     "tensorcore_count", "cores_per_chip"):
            val = getattr(info, name, None)
            if isinstance(val, int) and val > 0:
                return val
    except Exception:
        pass
    return 2  # harmless on single-TC chips: one duplicated, fully-masked block


def kl_div_categorical(alphas, *, target_block_bytes=2 << 20, num_slices=None):
    """Pallas implementation of KLDivCategorial.forward(alphas)."""
    D = alphas.shape[-1]
    N = int(alphas.size)
    log_dim = math.log(D)

    flat = alphas.reshape(-1)                 # free reshape (contiguous)
    rows = N // _LANE
    rem = N % _LANE

    tail_sum = jnp.float32(0.0)
    if rem:
        # Lane-ragged tail (< 128 elements): tiny, handled in plain JAX so the
        # bulk path needs no full-tensor padding copy.
        # TODO(synk): XLA may still materialize the prefix slice as a copy; a
        # fully zero-copy ragged path would need manual element-offset DMA.
        tail = flat[rows * _LANE:].astype(jnp.float32)
        tail_sum = jnp.sum(tail * jnp.log(tail + jnp.float32(_EPS)))
        flat = flat[: rows * _LANE]

    if rows == 0:
        return jnp.float32(log_dim) + tail_sum / jnp.float32(N)

    slab = flat.reshape(rows, _LANE)          # lane-dense 2-D slab

    # ---- tiling ------------------------------------------------------------
    itemsize = jnp.dtype(alphas.dtype).itemsize
    sub = {4: 8, 2: 16, 1: 32}.get(itemsize, 8)   # sublane multiple per dtype
    max_rows = max(sub, (target_block_bytes // (_LANE * itemsize) // sub) * sub)
    row_tile = min(max_rows, ((rows + sub - 1) // sub) * sub)
    total_blocks = pl.cdiv(rows, row_tile)

    if num_slices is None:
        num_slices = _num_tensorcores()
    num_slices = max(1, min(int(num_slices), total_blocks))

    inner = pl.cdiv(total_blocks, num_slices)
    covered_rows = num_slices * inner * row_tile
    needs_mask = bool(covered_rows != rows)

    def in_index_map(c, i):
        # Clamp so no DMA block starts entirely past the array; the kernel
        # masks those rows to zero anyway.
        return (jnp.minimum(c * inner + i, total_blocks - 1), 0)

    kernel = functools.partial(
        _kl_sum_kernel,
        row_tile=row_tile, valid_rows=rows, needs_mask=needs_mask)

    partials = pl.pallas_call(
        kernel,
        out_shape=jax.ShapeDtypeStruct((num_slices, 1), jnp.float32),
        grid_spec=pltpu.PrefetchScalarGridSpec(
            num_scalar_prefetch=0,
            grid=(num_slices, inner),
            in_specs=[pl.BlockSpec((row_tile, _LANE), in_index_map)],
            out_specs=pl.BlockSpec(
                (1, 1), lambda c, i: (c, 0),
                memory_space=pltpu.MemorySpace.SMEM),
            scratch_shapes=[pltpu.VMEM((8, _LANE), jnp.float32)]),
        compiler_params=pltpu.CompilerParams(
            dimension_semantics=("parallel", "arbitrary"),
            vmem_limit_bytes=32 * 1024 * 1024),
        cost_estimate=pl.CostEstimate(
            flops=3 * N, transcendentals=N,
            bytes_accessed=itemsize * N + 4 * num_slices),
    )(slab)

    return (jnp.float32(log_dim)
            + (jnp.sum(partials) + tail_sum) / jnp.float32(N))


def kl_div_categorical_ref(alphas):
    """Pure-JAX reference mirroring the PyTorch module."""
    log_dim = jnp.log(jnp.float32(alphas.shape[-1]))
    neg_entropy = alphas * jnp.log(alphas + _EPS)
    return jnp.mean(log_dim + neg_entropy)


if __name__ == "__main__":
    key = jax.random.PRNGKey(0)
    # Small tensor; categorical axis is the LAST axis (size 16).
    x = jax.random.normal(key, (2, 4, 16, 16), dtype=jnp.float32)
    alphas = jax.nn.softmax(x, axis=-1)          # valid categorical probs

    out = kl_div_categorical(alphas)
    out = jax.block_until_ready(out)

    ref = kl_div_categorical_ref(alphas)
    assert jnp.allclose(out, ref, atol=1e-5, rtol=1e-5), (out, ref)

    print("KERNEL_OK")
</pallas_src>

<mosaic_0001>
module attributes {stable_mosaic.version = 11 : i64} {
  func.func @_kl_sum_kernel(%arg0: i32, %arg1: i32, %arg2: memref<16x128xf32, #tpu.memory_space<vmem>>, %arg3: memref<1x1xf32, #tpu.memory_space<smem>>, %arg4: memref<8x128xf32, #tpu.memory_space<vmem>>) attributes {dimension_semantics = [#tpu.dimension_semantics<parallel>, #tpu.dimension_semantics<arbitrary>], iteration_bounds = array<i64: 1, 1>, scalar_prefetch = 0 : i64, scratch_operands = 1 : i64, tpu.core_type = #tpu.core_type<tc>, window_params = [{transform_indices = @transform_0, window_bounds = array<i64: 16, 128>}, {transform_indices = @transform_1, window_bounds = array<i64: 1, 1>}]} {
    %c0_i32 = arith.constant 0 : i32
    %0 = arith.cmpi eq, %arg1, %c0_i32 : i32
    %1 = arith.extui %0 : i1 to i32
    %c0_i32_0 = arith.constant 0 : i32
    %2 = arith.cmpi ne, %1, %c0_i32_0 : i32
    scf.if %2 {
      %cst_9 = arith.constant 0.000000e+00 : f32
      %16 = vector.broadcast %cst_9 : f32 to vector<8x128xf32>
      %c0_10 = arith.constant 0 : index
      %c0_11 = arith.constant 0 : index
      %17 = vector.load %arg4[%c0_10, %c0_11] : memref<8x128xf32, #tpu.memory_space<vmem>>, vector<8x128xf32>
      tpu.vector_store %arg4[%c0_10, %c0_11], %16 {strides = array<i32>} : memref<8x128xf32, #tpu.memory_space<vmem>>, vector<8x128xf32>,
    } else {
    }
    %c0 = arith.constant 0 : index
    %c0_1 = arith.constant 0 : index
    %3 = vector.load %arg2[%c0, %c0_1] : memref<16x128xf32, #tpu.memory_space<vmem>>, vector<16x128xf32>
    %cst = arith.constant 9.99999996E-13 : f32
    %4 = vector.broadcast %cst : f32 to vector<16x128xf32>
    %5 = arith.addf %3, %4 : vector<16x128xf32>
    %6 = math.log %5 : vector<16x128xf32>
    %7 = arith.mulf %3, %6 : vector<16x128xf32>
    %c0_2 = arith.constant 0 : index
    %c0_3 = arith.constant 0 : index
    %8 = vector.load %arg4[%c0_2, %c0_3] : memref<8x128xf32, #tpu.memory_space<vmem>>, vector<8x128xf32>
    %9 = vector.shape_cast %7 : vector<16x128xf32> to vector<2x8x128xf32>
    %cst_4 = arith.constant dense<0.000000e+00> : vector<8x128xf32>
    %10 = vector.multi_reduction <add>, %9, %cst_4 [0] : vector<2x8x128xf32> to vector<8x128xf32>
    %11 = arith.addf %8, %10 : vector<8x128xf32>
    %c0_5 = arith.constant 0 : index
    %c0_6 = arith.constant 0 : index
    %12 = vector.load %arg4[%c0_5, %c0_6] : memref<8x128xf32, #tpu.memory_space<vmem>>, vector<8x128xf32>
    tpu.vector_store %arg4[%c0_5, %c0_6], %11 {strides = array<i32>} : memref<8x128xf32, #tpu.memory_space<vmem>>, vector<8x128xf32>,
    %c0_i32_7 = arith.constant 0 : i32
    %13 = arith.cmpi eq, %arg1, %c0_i32_7 : i32
    %14 = arith.extui %13 : i1 to i32
    %c0_i32_8 = arith.constant 0 : i32
    %15 = arith.cmpi ne, %14, %c0_i32_8 : i32
    scf.if %15 {
      %c0_9 = arith.constant 0 : index
      %c0_10 = arith.constant 0 : index
      %16 = vector.load %arg4[%c0_9, %c0_10] : memref<8x128xf32, #tpu.memory_space<vmem>>, vector<8x128xf32>
      %17 = vector.shape_cast %16 : vector<8x128xf32> to vector<1x8x128xf32>
      %cst_11 = arith.constant dense<0.000000e+00> : vector<1xf32>
      %18 = vector.multi_reduction <add>, %17, %cst_11 [1, 2] : vector<1x8x128xf32> to vector<1xf32>
      %19 = vector.shape_cast %18 : vector<1xf32> to vector<1x1x1xf32>
      %20 = vector.extract %19[0, 0, 0] : f32 from vector<1x1x1xf32>
      %c0_12 = arith.constant 0 : index
      %c0_13 = arith.constant 0 : index
      %21 = memref.load %arg3[%c0_12, %c0_13] : memref<1x1xf32, #tpu.memory_space<smem>>
      memref.store %20, %arg3[%c0_12, %c0_13] : memref<1x1xf32, #tpu.memory_space<smem>>
    } else {
    }
    return
  }
  func.func @transform_0(%arg0: i32, %arg1: i32) -> (i32, i32) {
    %c1_i32 = arith.constant 1 : i32
    %0 = arith.muli %arg0, %c1_i32 : i32
    %1 = arith.addi %0, %arg1 : i32
    %c0_i32 = arith.constant 0 : i32
    %2 = arith.minsi %1, %c0_i32 : i32
    %c0_i32_0 = arith.constant 0 : i32
    %c0_i32_1 = arith.constant 0 : i32
    return %2, %c0_i32_0 : i32, i32
  }
  func.func @transform_1(%arg0: i32, %arg1: i32) -> (i32, i32) {
    %c0_i32 = arith.constant 0 : i32
    %c0_i32_0 = arith.constant 0 : i32
    return %arg0, %c0_i32 : i32, i32
  }
}

</mosaic_0001>

<llo_original>
// kernel: tpu_custom_call.1
$region0: #{tpu_custom_call.1}
  #allocation0 [shape = 'u32[]', space=smem, size = 0x4, offset = 0x4, fixed_abs, tag = 'smem constant byte address 0x4 - core index']
  #allocation1 [shape = 'u32[72,128]{1,0:T(1,128)}', space=vmem, size = 0x9000, scoped, tag = 'internal scratch']
  #allocation2 [shape = 'f32[8,128]{1,0:T(8,128)}', space=vmem, size = 0x1000, scoped, tag = 'scratch operand']
  %s0 = inlined_call_operand.hbm [shape: f32[16,128], index: 0, kind: input, shape index: {}]
  %s1 = inlined_call_operand.hbm [shape: f32[1,1], index: 1, kind: output, shape index: {}]
  %s2 = sld [smem:[#allocation0]]
  $region26: #{tpu_custom_call.1} parent=0
    _
  %s4 = ssub.s32 1, %s2
  %s5 = scalar_select 0, %s4, %s2
  $region1: #{tpu_custom_call.1} parent=0
    #allocation3 [shape = 'u8[8192]{0}', space=vmem, size = 0x2000, scoped, tag = 'input window, operand 0, single buffered']
    #allocation4 [shape = 's32[1]{0}', space=sflag, size = 0x4, scoped, tag = 'scoped memory for tpu_custom_call.1']
    #allocation5 [shape = 's32[1]{0}', space=sflag, size = 0x4, scoped, tag = 'scoped memory for tpu_custom_call.1']
    #allocation6 [shape = 'u8[512]{0}', space=smem, size = 0x200, scoped, tag = 'output window, operand 0, single buffered']
    %6 = vsyncpa [#allocation4], 0
    %7 = vsyncpa [#allocation5], 0
    // Predicated region
    $region2: #{tpu_custom_call.1} parent=1 // pred_check
      _
    $region3: #{tpu_custom_call.1} parent=1 // pred_check_branch
      %9 = sbr.rel (0) target = $region5
    $region4: #{tpu_custom_call.1} parent=1 // pred_region
      %s10 = sadd.s32 0, 0
      %p11 = scmp.lt.s32.totalorder %s10, 0
      %s12 = scalar_select %p11, %s10, 0
      %s13 = smul.u32 2, %s12
      %15 = vsyncadd [#allocation4], 0
      %s16 = smul.addr %s13, 8
      %s17 = scalar_lea.hbm %s0, %s16
      %s18 = sshll.u32 %s17, 4
      %s19 = int_to_ptr.hbm [resolvable:$true] %s18
      %s20 = sshll.u32 [#allocation3], 4
      %s21 = int_to_ptr.vmem [resolvable:$true] %s20
      %26 = dma.hbm_to_vmem [thread:$0]  %s19, 256, %s21, [#allocation4], 128, 128, 8
    $region5: #{tpu_custom_call.1} parent=1 // pred_fallthru
      _
    // Predicated region
    $region6: #{tpu_custom_call.1} parent=1 // pred_check
      _
    $region7: #{tpu_custom_call.1} parent=1 // pred_check_branch
      %28 = sbr.rel (0) target = $region9
    $region8: #{tpu_custom_call.1} parent=1 // pred_region
      %30 = dma.done [#allocation4], 256
    $region9: #{tpu_custom_call.1} parent=1 // pred_fallthru
      _
    %s31 = sadd.s32 0, 0
    %p32 = scmp.lt.s32.totalorder %s31, 0
    %s33 = scalar_select %p32, %s31, 0
    %s34 = smul.u32 2, %s33
    %p35 = scmp.eq.s32.totalorder 0, 0
    // Predicated region
    $region10: #{tpu_custom_call.1} parent=1 // pred_check
      %p36 = pneg %p35
    $region11: #{tpu_custom_call.1} parent=1 // pred_check_branch
      %38 = sbr.rel (%p36) target = $region13
    $region12: #{tpu_custom_call.1} parent=1 // pred_region
      %39 = vst [vmem:[#allocation2] sm:$0xff] 0.0
    $region13: #{tpu_custom_call.1} parent=1 // pred_fallthru
      _
    %v40 = vld [vmem:[#allocation3] sm:$0xff]
    %v41 = vld [vmem:[#allocation3 + $0x8] sm:$0xff]
    %v42 = vadd.f32 %v40, 1e-12
    %v43 = vadd.f32 %v41, 1e-12
    %v44 = vlog2.pop %v42
    %v45 = vmul.f32 %v44, 0.6931472
    %v46 = vlog2.pop %v43
    %v47 = vmul.f32 %v46, 0.6931472
    %v48 = vmul.f32 %v40, %v45
    %v49 = vmul.f32 %v41, %v47
    %v50 = vld [vmem:[#allocation2] sm:$0xff]
    %v51 = vadd.f32 %v48, %v49
    %v52 = vadd.f32 %v50, %v51
    %53 = vst [vmem:[#allocation2] sm:$0xff] %v52
    // Predicated region
    $region14: #{tpu_custom_call.1} parent=1 // pred_check
      %p54 = pneg %p35
    $region15: #{tpu_custom_call.1} parent=1 // pred_check_branch
      %56 = sbr.rel (%p54) target = $region17
    $region16: #{tpu_custom_call.1} parent=1 // pred_region
      %v57 = vld [vmem:[#allocation2] sm:$0xff]
      %58 = vadd.xlane.f32.xlu0 %v57
      %v59 = vpop.xlane.xlu0 %58
      %v60 = vrot.slane %v59, 4
      %v61 = vadd.f32 %v59, %v60
      %v62 = vrot.slane %v61, 2
      %v63 = vadd.f32 %v61, %v62
      %v64 = vrot.slane %v63, 1
      %v65 = vadd.f32 %v63, %v64
      %s66 = vtos %v65
      %s67 = scalar_lea.smem [#allocation6], 0
      %68 = sst [smem:[%s67]] %s66
    $region17: #{tpu_custom_call.1} parent=1 // pred_fallthru
      _
    // Predicated region
    $region18: #{tpu_custom_call.1} parent=1 // pred_check
      _
    $region19: #{tpu_custom_call.1} parent=1 // pred_check_branch
      %70 = sbr.rel (0) target = $region21
    $region20: #{tpu_custom_call.1} parent=1 // pred_region
      %72 = vsyncadd [#allocation5], 0
      %s74 = sshll.u32 %s1, 4
      %s75 = int_to_ptr.hbm [resolvable:$true] %s74
      %77 = dma.smem_to_hbm [#allocation6], 16, %s75, [#allocation5]
    $region21: #{tpu_custom_call.1} parent=1 // pred_fallthru
      _
    // Predicated region
    $region22: #{tpu_custom_call.1} parent=1 // pred_check
      _
    $region23: #{tpu_custom_call.1} parent=1 // pred_check_branch
      %79 = sbr.rel (0) target = $region25
    $region24: #{tpu_custom_call.1} parent=1 // pred_region
      %81 = dma.done [#allocation5], 16
    $region25: #{tpu_custom_call.1} parent=1 // pred_fallthru
      _
    %82 = sfence
    %83 = vsyncpa [#allocation4], 1
    %84 = vsyncpa [#allocation5], 1

</llo_original>
